<compile_context>
chip_gen: v7x
topology: tpu7x:2x2x1
jax: 0.10.0
libtpu: 0.0.40
codegen_flags: <defaults>
</compile_context>

<pallas_src>
import functools
import math

import jax
import jax.numpy as jnp
from jax import lax
from jax.experimental import pallas as pl
from jax.experimental.pallas import tpu as pltpu


# ----------------------------- Pallas kernels ------------------------------

def _matmul_bias_kernel(x_ref, w_ref, b_ref, o_ref, acc_ref):
    """y = x @ w + b, tiled over (M, N, K); K is the reduction grid axis."""
    k = pl.program_id(2)

    @pl.when(k == 0)
    def _init():
        acc_ref[...] = jnp.zeros_like(acc_ref)

    acc_ref[...] += jnp.dot(x_ref[...], w_ref[...],
                            preferred_element_type=jnp.float32)

    @pl.when(k == pl.num_programs(2) - 1)
    def _finalize():
        # Bias added once per output tile (not once per K step).
        o_ref[...] = (acc_ref[...] + b_ref[...].astype(jnp.float32)).astype(o_ref.dtype)


def _attn_kernel(q_ref, k_ref, v_ref, o_ref, *, head_num, head_dim):
    """One batch element, all heads.  Blocks are (1, S, head_num*head_dim)."""
    scale = 1.0 / math.sqrt(head_dim)
    q_all = q_ref[0]                       # (S, D), native dtype (no upcast)
    k_all = k_ref[0]
    v_all = v_ref[0]
    for h in range(head_num):              # static unroll over heads
        lo = h * head_dim
        hi = lo + head_dim
        q = q_all[:, lo:hi]                # (S, Dh)
        k = k_all[:, lo:hi]
        v = v_all[:, lo:hi]
        # scores = (Q K^T) / sqrt(Dh): contract the last dims directly
        # (no explicit k.T / XLU transpose), accumulate in f32 on the MXU.
        s = lax.dot_general(q, k, (((1,), (1,)), ((), ())),
                            preferred_element_type=jnp.float32) * scale
        # softmax over the key axis (torch Softmax(dim=1)), f32 math.
        m = jnp.max(s, axis=-1, keepdims=True)
        p = jnp.exp(s - m)
        denom = jnp.sum(p, axis=-1, keepdims=True)
        r = pl.reciprocal(denom, approx=True)   # EUP slot (otherwise idle)
        r = r * (2.0 - denom * r)               # one Newton step -> ~f32 exact
        p = p * r
        o = lax.dot_general(p.astype(v.dtype), v, (((1,), (0,)), ((), ())),
                            preferred_element_type=jnp.float32)
        o_ref[0, :, lo:hi] = o.astype(o_ref.dtype)


# ------------------------------- wrappers -----------------------------------

def _pick_tile(dim, target):
    """Largest 128-aligned tile <= target that divides dim, else the full dim.

    128-aligned tiles feed both the v5e 4x128x128 MXU and (as multiples) the
    v6e/v7x 2x256x256 MXU; small dims fall back to a single full-dim block.
    """
    if dim <= target:
        return dim
    t = (target // 128) * 128
    while t >= 128:
        if dim % t == 0:
            return t
        t -= 128
    return dim


def _linear(x2d, w, b, *, tm_target=256, tn_target=256, tk_target=512):
    """x2d: (M, K), w: (K, N), b: (1, N) -> (M, N), tiled + pipelined."""
    M, K = x2d.shape
    _, N = w.shape
    tm = _pick_tile(M, tm_target)
    tn = _pick_tile(N, tn_target)
    tk = _pick_tile(K, tk_target)
    # VMEM budget per step (double-buffered inputs + acc + out) stays well under
    # the default scoped limit for these tiles; raise vmem_limit_bytes if tiles
    # are enlarged (budget against 64 MiB physical on v7x).
    return pl.pallas_call(
        _matmul_bias_kernel,
        out_shape=jax.ShapeDtypeStruct((M, N), x2d.dtype),
        grid=(M // tm, N // tn, K // tk),
        in_specs=[
            pl.BlockSpec((tm, tk), lambda i, j, k: (i, k)),
            pl.BlockSpec((tk, tn), lambda i, j, k: (k, j)),
            pl.BlockSpec((1, tn), lambda i, j, k: (0, j)),
        ],
        out_specs=pl.BlockSpec((tm, tn), lambda i, j, k: (i, j)),
        scratch_shapes=[pltpu.VMEM((tm, tn), jnp.float32)],
        compiler_params=pltpu.CompilerParams(
            dimension_semantics=("parallel", "parallel", "arbitrary")),
    )(x2d, w, b)


def _attention_bsd(q_b, k_b, v_b, head_num, head_dim):
    """q_b/k_b/v_b: (B, S, D) -> (B, S, D); one program per batch element."""
    B, S, D = q_b.shape
    kernel = functools.partial(_attn_kernel, head_num=head_num, head_dim=head_dim)
    return pl.pallas_call(
        kernel,
        out_shape=jax.ShapeDtypeStruct((B, S, D), q_b.dtype),
        grid=(B,),
        in_specs=[pl.BlockSpec((1, S, D), lambda b: (b, 0, 0))] * 3,
        out_specs=pl.BlockSpec((1, S, D), lambda b: (b, 0, 0)),
        compiler_params=pltpu.CompilerParams(dimension_semantics=("parallel",)),
    )(q_b, k_b, v_b)


def multi_head_attention(query, key, value, params, head_num, mask=None):
    """query/key/value: (seq, batch, model_dim).  Returns (seq, batch, model_dim)."""
    assert mask is None  # TODO(synk): mask path not implemented
    S, B, D = query.shape
    Dh = D // head_num
    wq, bq, wk, bk, wv, bv = params

    if (query is key) and (query is value):
        # Self-attention: fused QKV projection — one matmul, x read once.
        w_qkv = jnp.concatenate([wq, wk, wv], axis=1)           # (D, 3D)
        b_qkv = jnp.concatenate([bq, bk, bv], axis=1)           # (1, 3D)
        qkv = _linear(query.reshape(S * B, D), w_qkv, b_qkv)    # (S*B, 3D)
        qkv = qkv.reshape(S, B, 3, D)
        qkv = jnp.transpose(qkv, (2, 1, 0, 3))                  # (3, B, S, D): one layout pass
        q_b, k_b, v_b = qkv[0], qkv[1], qkv[2]
    else:
        # Cross-attention: inputs differ, three projections.
        def proj(x, w, b):
            y = _linear(x.reshape(S * B, D), w, b).reshape(S, B, D)
            return jnp.transpose(y, (1, 0, 2))                  # (B, S, D)
        q_b = proj(query, wq, bq)
        k_b = proj(key, wk, bk)
        v_b = proj(value, wv, bv)

    out_b = _attention_bsd(q_b, k_b, v_b, head_num, Dh)         # (B, S, D)
    # Dropout is identity at inference time (module eval mode).
    return jnp.transpose(out_b, (1, 0, 2))                      # (S, B, D)


# ------------------------- deterministic parameters --------------------------

def init_params(key, model_dim, head_num, dtype=jnp.float32):
    # PyTorch nn.Linear default init: U(-1/sqrt(fan_in), 1/sqrt(fan_in)).
    bound = 1.0 / math.sqrt(model_dim)
    ks = jax.random.split(key, 6)

    def u(k, shape):
        return jax.random.uniform(k, shape, dtype, minval=-bound, maxval=bound)

    # weights stored transposed: (in_features, out_features)
    wq, bq = u(ks[0], (model_dim, model_dim)), u(ks[1], (1, model_dim))
    wk, bk = u(ks[2], (model_dim, model_dim)), u(ks[3], (1, model_dim))
    wv, bv = u(ks[4], (model_dim, model_dim)), u(ks[5], (1, model_dim))
    return (wq, bq, wk, bk, wv, bv)


# ------------------------------ reference (JAX) ------------------------------

def _reference(query, key, value, params, head_num):
    S, B, D = query.shape
    Dh = D // head_num
    wq, bq, wk, bk, wv, bv = params
    q = (query.reshape(S * B, D) @ wq + bq).reshape(S, B, head_num, Dh)
    k = (key.reshape(S * B, D) @ wk + bk).reshape(S, B, head_num, Dh)
    v = (value.reshape(S * B, D) @ wv + bv).reshape(S, B, head_num, Dh)
    s = jnp.einsum('ibhd,jbhd->ijbh', q, k) / math.sqrt(Dh)
    p = jax.nn.softmax(s, axis=1)
    o = jnp.einsum('ijbh,jbhd->ibhd', p, v)
    return o.reshape(S, B, head_num * Dh)


# ---------------------------------- main -------------------------------------

if __name__ == "__main__":
    head_num = 4
    model_dim = 32
    seq = 8
    batch = 2

    root = jax.random.PRNGKey(0)
    kp, kq, kk, kv = jax.random.split(root, 4)
    params = init_params(kp, model_dim, head_num)

    query = jax.random.normal(kq, (seq, batch, model_dim), jnp.float32)
    key = jax.random.normal(kk, (seq, batch, model_dim), jnp.float32)
    value = jax.random.normal(kv, (seq, batch, model_dim), jnp.float32)

    # Cross-attention path (three tiled projections).
    out = multi_head_attention(query, key, value, params, head_num)
    out = jax.block_until_ready(out)
    ref = _reference(query, key, value, params, head_num)
    assert out.shape == (seq, batch, model_dim)
    assert jnp.allclose(out, ref, atol=1e-4, rtol=1e-4)

    # Self-attention path (fused QKV projection).
    out_sa = multi_head_attention(query, query, query, params, head_num)
    out_sa = jax.block_until_ready(out_sa)
    ref_sa = _reference(query, query, query, params, head_num)
    assert jnp.allclose(out_sa, ref_sa, atol=1e-4, rtol=1e-4)

    print("KERNEL_OK")
</pallas_src>

<mosaic_0001>
module attributes {stable_mosaic.version = 11 : i64} {
  func.func @_matmul_bias_kernel(%arg0: i32, %arg1: i32, %arg2: i32, %arg3: memref<16x32xf32, #tpu.memory_space<vmem>>, %arg4: memref<32x32xf32, #tpu.memory_space<vmem>>, %arg5: memref<1x32xf32, #tpu.memory_space<vmem>>, %arg6: memref<16x32xf32, #tpu.memory_space<vmem>>, %arg7: memref<16x32xf32, #tpu.memory_space<vmem>>) attributes {dimension_semantics = [#tpu.dimension_semantics<parallel>, #tpu.dimension_semantics<parallel>, #tpu.dimension_semantics<arbitrary>], iteration_bounds = array<i64: 1, 1, 1>, scalar_prefetch = 0 : i64, scratch_operands = 1 : i64, tpu.core_type = #tpu.core_type<tc>, window_params = [{transform_indices = @transform_0, window_bounds = array<i64: 16, 32>}, {transform_indices = @transform_1, window_bounds = array<i64: 32, 32>}, {transform_indices = @transform_2, window_bounds = array<i64: 1, 32>}, {transform_indices = @transform_3, window_bounds = array<i64: 16, 32>}]} {
    %c0_i32 = arith.constant 0 : i32
    %0 = arith.cmpi eq, %arg2, %c0_i32 : i32
    %1 = arith.extui %0 : i1 to i32
    %c0_i32_0 = arith.constant 0 : i32
    %2 = arith.cmpi ne, %1, %c0_i32_0 : i32
    scf.if %2 {
      %cst_10 = arith.constant 0.000000e+00 : f32
      %12 = vector.broadcast %cst_10 : f32 to vector<16x32xf32>
      %c0_11 = arith.constant 0 : index
      %c0_12 = arith.constant 0 : index
      %13 = vector.load %arg7[%c0_11, %c0_12] : memref<16x32xf32, #tpu.memory_space<vmem>>, vector<16x32xf32>
      tpu.vector_store %arg7[%c0_11, %c0_12], %12 {strides = array<i32>} : memref<16x32xf32, #tpu.memory_space<vmem>>, vector<16x32xf32>,
    } else {
    }
    %c0 = arith.constant 0 : index
    %c0_1 = arith.constant 0 : index
    %3 = vector.load %arg7[%c0, %c0_1] : memref<16x32xf32, #tpu.memory_space<vmem>>, vector<16x32xf32>
    %c0_2 = arith.constant 0 : index
    %c0_3 = arith.constant 0 : index
    %4 = vector.load %arg3[%c0_2, %c0_3] : memref<16x32xf32, #tpu.memory_space<vmem>>, vector<16x32xf32>
    %c0_4 = arith.constant 0 : index
    %c0_5 = arith.constant 0 : index
    %5 = vector.load %arg4[%c0_4, %c0_5] : memref<32x32xf32, #tpu.memory_space<vmem>>, vector<32x32xf32>
    %cst = arith.constant dense<0.000000e+00> : vector<16x32xf32>
    %6 = tpu.matmul %4, %5, %cst {dimension_numbers = #tpu.dot_dimension_numbers<[1], [0], [0], [1], [0, 0, 1, 1], [], []>} : vector<16x32xf32>, vector<32x32xf32>, vector<16x32xf32> -> vector<16x32xf32>
    %7 = arith.addf %3, %6 : vector<16x32xf32>
    %c0_6 = arith.constant 0 : index
    %c0_7 = arith.constant 0 : index
    %8 = vector.load %arg7[%c0_6, %c0_7] : memref<16x32xf32, #tpu.memory_space<vmem>>, vector<16x32xf32>
    tpu.vector_store %arg7[%c0_6, %c0_7], %7 {strides = array<i32>} : memref<16x32xf32, #tpu.memory_space<vmem>>, vector<16x32xf32>,
    %c0_i32_8 = arith.constant 0 : i32
    %9 = arith.cmpi eq, %arg2, %c0_i32_8 : i32
    %10 = arith.extui %9 : i1 to i32
    %c0_i32_9 = arith.constant 0 : i32
    %11 = arith.cmpi ne, %10, %c0_i32_9 : i32
    scf.if %11 {
      %c0_10 = arith.constant 0 : index
      %c0_11 = arith.constant 0 : index
      %12 = vector.load %arg7[%c0_10, %c0_11] : memref<16x32xf32, #tpu.memory_space<vmem>>, vector<16x32xf32>
      %c0_12 = arith.constant 0 : index
      %c0_13 = arith.constant 0 : index
      %13 = vector.load %arg5[%c0_12, %c0_13] : memref<1x32xf32, #tpu.memory_space<vmem>>, vector<1x32xf32>
      %14 = vector.broadcast %13 : vector<1x32xf32> to vector<16x32xf32>
      %15 = arith.addf %12, %14 : vector<16x32xf32>
      %c0_14 = arith.constant 0 : index
      %c0_15 = arith.constant 0 : index
      %16 = vector.load %arg6[%c0_14, %c0_15] : memref<16x32xf32, #tpu.memory_space<vmem>>, vector<16x32xf32>
      tpu.vector_store %arg6[%c0_14, %c0_15], %15 {strides = array<i32>} : memref<16x32xf32, #tpu.memory_space<vmem>>, vector<16x32xf32>,
    } else {
    }
    return
  }
  func.func @transform_0(%arg0: i32, %arg1: i32, %arg2: i32) -> (i32, i32) {
    %c0_i32 = arith.constant 0 : i32
    return %arg0, %arg2 : i32, i32
  }
  func.func @transform_1(%arg0: i32, %arg1: i32, %arg2: i32) -> (i32, i32) {
    %c0_i32 = arith.constant 0 : i32
    return %arg2, %arg1 : i32, i32
  }
  func.func @transform_2(%arg0: i32, %arg1: i32, %arg2: i32) -> (i32, i32) {
    %c0_i32 = arith.constant 0 : i32
    %c0_i32_0 = arith.constant 0 : i32
    return %c0_i32, %arg1 : i32, i32
  }
  func.func @transform_3(%arg0: i32, %arg1: i32, %arg2: i32) -> (i32, i32) {
    %c0_i32 = arith.constant 0 : i32
    return %arg0, %arg1 : i32, i32
  }
}

</mosaic_0001>

<llo_original>
// kernel: tpu_custom_call.1
$region0: #{tpu_custom_call.1}
  #allocation0 [shape = 'u32[]', space=smem, size = 0x4, offset = 0x4, fixed_abs, tag = 'smem constant byte address 0x4 - core index']
  #allocation1 [shape = 'u32[144,128]{1,0:T(1,128)}', space=vmem, size = 0x12000, scoped, tag = 'internal scratch']
  #allocation2 [shape = 'f32[16,32]{1,0:T(8,128)}', space=vmem, size = 0x2000, scoped, tag = 'scratch operand']
  %s0 = inlined_call_operand.hbm [shape: f32[16,32], index: 0, kind: input, shape index: {}]
  %s1 = inlined_call_operand.hbm [shape: f32[32,32], index: 1, kind: input, shape index: {}]
  %s2 = inlined_call_operand.vmem [shape: f32[1,32], index: 2, kind: input, shape index: {}]
  %s3 = inlined_call_operand.hbm [shape: f32[16,32], index: 3, kind: output, shape index: {}]
  %s4 = sld [smem:[#allocation0]]
  $region38: #{tpu_custom_call.1} parent=0
    _
  %s6 = ssub.s32 1, %s4
  %s7 = scalar_select 0, %s6, %s4
  $region1: #{tpu_custom_call.1} parent=0
    #allocation3 [shape = 'u8[8192]{0}', space=vmem, size = 0x2000, scoped, tag = 'input window, operand 0, single buffered']
    #allocation4 [shape = 's32[1]{0}', space=sflag, size = 0x4, scoped, tag = 'scoped memory for tpu_custom_call.1']
    #allocation5 [shape = 's32[1]{0}', space=sflag, size = 0x4, scoped, tag = 'scoped memory for tpu_custom_call.1']
    #allocation6 [shape = 'u8[16384]{0}', space=vmem, size = 0x4000, scoped, tag = 'input window, operand 1, single buffered']
    #allocation7 [shape = 's32[1]{0}', space=sflag, size = 0x4, scoped, tag = 'scoped memory for tpu_custom_call.1']
    #allocation8 [shape = 'u8[8192]{0}', space=vmem, size = 0x2000, scoped, tag = 'output window, operand 0, single buffered']
    %8 = vsyncpa [#allocation4], 0
    %9 = vsyncpa [#allocation7], 0
    %10 = vsyncpa [#allocation5], 0
    // Predicated region
    $region2: #{tpu_custom_call.1} parent=1 // pred_check
      _
    $region3: #{tpu_custom_call.1} parent=1 // pred_check_branch
      %12 = sbr.rel (0) target = $region5
    $region4: #{tpu_custom_call.1} parent=1 // pred_region
      %s14 = ssub.s32 256, 256
      %15 = vsyncadd [#allocation4], %s14
      %s16 = sshll.u32 [#allocation3], 4
      %s17 = int_to_ptr.vmem [resolvable:$true] %s16
      %22 = dma.hbm_to_vmem [thread:$0]  %s0, 256, %s17, [#allocation4], 128, 128, 8
    $region5: #{tpu_custom_call.1} parent=1 // pred_fallthru
      _
    // Predicated region
    $region6: #{tpu_custom_call.1} parent=1 // pred_check
      _
    $region7: #{tpu_custom_call.1} parent=1 // pred_check_branch
      %24 = sbr.rel (0) target = $region9
    $region8: #{tpu_custom_call.1} parent=1 // pred_region
      %s26 = ssub.s32 512, 512
      %27 = vsyncadd [#allocation7], %s26
      %s28 = sshll.u32 [#allocation6], 4
      %s29 = int_to_ptr.vmem [resolvable:$true] %s28
      %34 = dma.hbm_to_vmem [thread:$0]  %s1, 512, %s29, [#allocation7], 128, 128, 8
    $region9: #{tpu_custom_call.1} parent=1 // pred_fallthru
      _
    // Predicated region
    $region10: #{tpu_custom_call.1} parent=1 // pred_check
      _
    $region11: #{tpu_custom_call.1} parent=1 // pred_check_branch
      %36 = sbr.rel (0) target = $region13
    $region12: #{tpu_custom_call.1} parent=1 // pred_region
      _
    $region13: #{tpu_custom_call.1} parent=1 // pred_fallthru
      _
    // Predicated region
    $region14: #{tpu_custom_call.1} parent=1 // pred_check
      _
    $region15: #{tpu_custom_call.1} parent=1 // pred_check_branch
      %38 = sbr.rel (0) target = $region17
    $region16: #{tpu_custom_call.1} parent=1 // pred_region
      %39 = dma.done [#allocation4], 256
    $region17: #{tpu_custom_call.1} parent=1 // pred_fallthru
      _
    // Predicated region
    $region18: #{tpu_custom_call.1} parent=1 // pred_check
      _
    $region19: #{tpu_custom_call.1} parent=1 // pred_check_branch
      %41 = sbr.rel (0) target = $region21
    $region20: #{tpu_custom_call.1} parent=1 // pred_region
      %42 = dma.done [#allocation7], 512
    $region21: #{tpu_custom_call.1} parent=1 // pred_fallthru
      _
    %p43 = scmp.eq.s32.totalorder 0, 0
    // Predicated region
    $region22: #{tpu_custom_call.1} parent=1 // pred_check
      %p44 = pneg %p43
    $region23: #{tpu_custom_call.1} parent=1 // pred_check_branch
      %46 = sbr.rel (%p44) target = $region25
    $region24: #{tpu_custom_call.1} parent=1 // pred_region
      %vm47 = vcmask 261120
      %48 = vst.msk [vmem:[#allocation2] sm:$0xff] %vm47, 0.0
      %49 = vst.msk [vmem:[#allocation2 + $0x8] sm:$0xff] %vm47, 0.0
    $region25: #{tpu_custom_call.1} parent=1 // pred_fallthru
      _
    %v50 = vld [vmem:[#allocation2] sm:$0xff]
    %v51 = vld [vmem:[#allocation2 + $0x8] sm:$0xff]
    %v52 = vld [vmem:[#allocation3] sm:$0xff]
    %v53 = vld [vmem:[#allocation3 + $0x8] sm:$0xff]
    %v54 = vld [vmem:[#allocation6] sm:$0xff]
    %v55 = vld [vmem:[#allocation6 + $0x8] sm:$0xff]
    %v56 = vld [vmem:[#allocation6 + $0x10] sm:$0xff]
    %v57 = vld [vmem:[#allocation6 + $0x18] sm:$0xff]
    %vm58 = vcmask 261120
    %v60 = vsel %vm58, %v52, 0
    %v63 = vsel %vm58, %v53, 0
    %65 = vmatprep.subr.mxu0 0.0
    %66 = vmatpush1.msra.mxu0 %v54
    %67 = vmatprep.subr.mxu0 0.0
    %68 = vmatpush1.msra.mxu0 %v55
    %69 = vmatprep.subr.mxu0 0.0
    %70 = vmatpush1.msra.mxu0 %v56
    %71 = vmatprep.subr.mxu0 0.0
    %72 = vmatpush1.msra.mxu0 %v57
    %73 = vmatprep.subr.mxu0 0.0
    %74 = vmatpush1.msra.mxu0 0.0
    %75 = vmatprep.subr.mxu0 0.0
    %76 = vmatpush1.msra.mxu0 0.0
    %77 = vmatprep.subr.mxu0 0.0
    %78 = vmatpush1.msra.mxu0 0.0
    %79 = vmatprep.subr.mxu0 0.0
    %80 = vmatpush1.msra.mxu0 0.0
    %81 = vmatprep.subr.mxu0 0.0
    %82 = vmatpush1.msra.mxu0 0.0
    %83 = vmatprep.subr.mxu0 0.0
    %84 = vmatpush1.msra.mxu0 0.0
    %85 = vmatprep.subr.mxu0 0.0
    %86 = vmatpush1.msra.mxu0 0.0
    %87 = vmatprep.subr.mxu0 0.0
    %88 = vmatpush1.msra.mxu0 0.0
    %89 = vmatprep.subr.mxu0 0.0
    %90 = vmatpush1.msra.mxu0 0.0
    %91 = vmatprep.subr.mxu0 0.0
    %92 = vmatpush1.msra.mxu0 0.0
    %93 = vmatprep.subr.mxu0 0.0
    %94 = vmatpush1.msra.mxu0 0.0
    %95 = vmatprep.subr.mxu0 0.0
    %96 = vmatpush1.msra.mxu0 0.0
    %97 = vmatprep.subr.mxu0 0.0
    %98 = vmatpush1.msra.mxu0 0.0
    %99 = vmatprep.subr.mxu0 0.0
    %100 = vmatpush1.msra.mxu0 0.0
    %101 = vmatprep.subr.mxu0 0.0
    %102 = vmatpush1.msra.mxu0 0.0
    %103 = vmatprep.subr.mxu0 0.0
    %104 = vmatpush1.msra.mxu0 0.0
    %105 = vmatprep.subr.mxu0 0.0
    %106 = vmatpush1.msra.mxu0 0.0
    %107 = vmatprep.subr.mxu0 0.0
    %108 = vmatpush1.msra.mxu0 0.0
    %109 = vmatprep.subr.mxu0 0.0
    %110 = vmatpush1.msra.mxu0 0.0
    %111 = vmatprep.subr.mxu0 0.0
    %112 = vmatpush1.msra.mxu0 0.0
    %113 = vmatprep.subr.mxu0 0.0
    %114 = vmatpush1.msra.mxu0 0.0
    %115 = vmatprep.subr.mxu0 0.0
    %116 = vmatpush1.msra.mxu0 0.0
    %117 = vmatprep.subr.mxu0 0.0
    %118 = vmatpush1.msra.mxu0 0.0
    %119 = vmatprep.subr.mxu0 0.0
    %120 = vmatpush1.msra.mxu0 0.0
    %121 = vmatprep.subr.mxu0 0.0
    %122 = vmatpush1.msra.mxu0 0.0
    %123 = vmatprep.subr.mxu0 0.0
    %124 = vmatpush1.msra.mxu0 0.0
    %125 = vmatprep.subr.mxu0 0.0
    %126 = vmatpush1.msra.mxu0 0.0
    %127 = vmatprep.subr.mxu0 0.0
    %128 = vmatpush1.msra.mxu0 0.0
    %129 = vmatprep.mubr.f32.mxu0 0.0
    %130 = vmatmul.mubr.f32.gmra.mrb[0].mxu0 %v60
    %v131 = vpop.f32.mrb[0].mxu0
    %v132 = vadd.f32 0.0, %v131
    %v133 = vpop.f32.mrb[0].mxu0
    %134 = vmatprep.mubr.f32.mxu0 0.0
    %135 = vmatmul.mubr.f32.gmra.mrb[0].mxu0 %v63
    %v136 = vpop.f32.mrb[0].mxu0
    %v137 = vadd.f32 0.0, %v136
    %v138 = vpop.f32.mrb[0].mxu0
    %139 = vdwg.mxu0
    %v140 = vadd.f32 %v50, %v132
    %v141 = vadd.f32 %v51, %v137
    %142 = vst.msk [vmem:[#allocation2] sm:$0xff] %vm58, %v140
    %143 = vst.msk [vmem:[#allocation2 + $0x8] sm:$0xff] %vm58, %v141
    // Predicated region
    $region26: #{tpu_custom_call.1} parent=1 // pred_check
      %p144 = pneg %p43
    $region27: #{tpu_custom_call.1} parent=1 // pred_check_branch
      %146 = sbr.rel (%p144) target = $region29
    $region28: #{tpu_custom_call.1} parent=1 // pred_region
      %v147 = vld [vmem:[#allocation2] sm:$0xff]
      %v148 = vld [vmem:[#allocation2 + $0x8] sm:$0xff]
      %v149 = vld [vmem:[%s2] sm:$0x1]
      %v151 = vlaneseq
      %v152 = vshrl.u32 %v151, 7
      %v153 = vsub.s32 0, %v152
      %v154 = vrot.slane %v149, %v153
      %v156 = vadd.f32 %v147, %v154
      %v157 = vadd.f32 %v148, %v154
      %158 = vst.msk [vmem:[#allocation8] sm:$0xff] %vm58, %v156
      %159 = vst.msk [vmem:[#allocation8 + $0x8] sm:$0xff] %vm58, %v157
    $region29: #{tpu_custom_call.1} parent=1 // pred_fallthru
      _
    // Predicated region
    $region30: #{tpu_custom_call.1} parent=1 // pred_check
      _
    $region31: #{tpu_custom_call.1} parent=1 // pred_check_branch
      %161 = sbr.rel (0) target = $region33
    $region32: #{tpu_custom_call.1} parent=1 // pred_region
      %s163 = ssub.s32 256, 256
      %164 = vsyncadd [#allocation5], %s163
      %s165 = sshll.u32 [#allocation8], 4
      %s166 = int_to_ptr.vmem [resolvable:$true] %s165
      %171 = dma.vmem_to_hbm [thread:$0]  %s166, 256, %s3, [#allocation5], 128, 128, 8
    $region33: #{tpu_custom_call.1} parent=1 // pred_fallthru
      _
    // Predicated region
    $region34: #{tpu_custom_call.1} parent=1 // pred_check
      _
    $region35: #{tpu_custom_call.1} parent=1 // pred_check_branch
      %173 = sbr.rel (0) target = $region37
    $region36: #{tpu_custom_call.1} parent=1 // pred_region
      %174 = dma.done [#allocation5], 256
    $region37: #{tpu_custom_call.1} parent=1 // pred_fallthru
      _
    %175 = vsyncpa [#allocation4], 1
    %176 = vsyncpa [#allocation7], 1
    %177 = vsyncpa [#allocation5], 1

</llo_original>
